<compile_context>
chip_gen: v7x
topology: tpu7x:2x2x1
jax: 0.10.0
libtpu: 0.0.40
codegen_flags: <defaults>
</compile_context>

<pallas_src>
import functools

import jax
import jax.numpy as jnp
from jax import lax
from jax.experimental import pallas as pl
from jax.experimental.pallas import tpu as pltpu


def _round_up(n, m):
    return ((n + m - 1) // m) * m


def _softplus(z):
    # Matches torch.nn.Softplus(beta=1, threshold=20):
    #   softplus(x) = log(1 + exp(x)), but returns x when x > 20.
    zc = jnp.minimum(z, 20.0)  # avoid overflow in exp on the masked branch
    return jnp.where(z > 20.0, z, jnp.log1p(jnp.exp(zc)))


def mlp_kernel(x_ref,
               w1_ref, b1_ref,
               w2_ref, b2_ref,
               w3_ref, b3_ref,
               w4_ref, b4_ref,
               o_ref, *, chunk):
    # x_ref: [bt, in]            batch-major input tile (contiguous HBM slab per step)
    # wN_ref: [outN, inN]        bN_ref: [outN, 1] (broadcast along lanes)
    # o_ref: [out, bt]           feature-major output tile (lane-dense stores)
    bt = x_ref.shape[0]
    nchunks = bt // chunk

    w1, b1 = w1_ref[...], b1_ref[...]
    w2, b2 = w2_ref[...], b2_ref[...]
    w3, b3 = w3_ref[...], b3_ref[...]
    w4, b4 = w4_ref[...], b4_ref[...]

    def body(c, carry):
        col = pl.multiple_of(c * chunk, chunk)
        xc = x_ref[pl.ds(col, chunk), :]                       # [chunk, in]
        # h1 = W1 @ xc^T : contract over in_size, batch ends up on the lane axis.
        h1 = lax.dot_general(w1, xc, (((1,), (1,)), ((), ())),
                             preferred_element_type=jnp.float32) + b1
        h1 = jnp.maximum(h1, 0.0)                              # [h1, chunk]
        h2 = jnp.maximum(
            jnp.dot(w2, h1, preferred_element_type=jnp.float32) + b2, 0.0)
        h3 = jnp.maximum(
            jnp.dot(w3, h2, preferred_element_type=jnp.float32) + b3, 0.0)
        z4 = jnp.dot(w4, h3, preferred_element_type=jnp.float32) + b4
        o_ref[:, pl.ds(col, chunk)] = _softplus(z4).astype(o_ref.dtype)
        return carry

    # Fused per-chunk 4-layer pipeline: intermediates live in vregs, not VMEM.
    lax.fori_loop(0, nchunks, body, 0, unroll=True)


def _pick_batch_tile(B, batch_tile):
    """Lane-aligned batch tile + in-kernel chunk size."""
    Bp = _round_up(B, 128)
    bt = max(128, min(batch_tile, Bp))
    # Keep >= 2 grid steps when the batch allows it: enables megacore sharding on
    # v7x and gives the BlockSpec DMA pipeline something to overlap.
    if bt >= Bp and Bp >= 256:
        bt = _round_up(pl.cdiv(Bp, 2), 128)
    if bt >= 512:
        bt = (bt // 512) * 512   # multiple of the in-kernel lane-chunk size
    else:
        bt = _round_up(bt, 128)
    chunk = min(512, bt)
    assert bt % chunk == 0 and bt % 128 == 0
    return bt, chunk


@functools.partial(jax.jit, static_argnames=("batch_tile",))
def matrix_factorization_net(x, params, *, batch_tile=4096):
    """Fused 4-layer MLP forward pass as a single Pallas kernel.

    x: [B, input_size] float32 (batch-major, torch-style)
    params: dict with w1..w4 stored as [out, in] (torch layout) and b1..b4 as [out, 1].
    Returns: [B, output_size] float32.
    """
    B, in_size = x.shape
    w1, b1 = params["w1"], params["b1"]
    w2, b2 = params["w2"], params["b2"]
    w3, b3 = params["w3"], params["b3"]
    w4, b4 = params["w4"], params["b4"]
    out_size = w4.shape[0]

    # Cap the tile so double-buffered x/out tiles + per-chunk intermediates stay well
    # under VMEM even on v7x (64 MiB physical / 32 MiB default scoped limit):
    # at bt=8192 the x tile is ~4 MiB (lane-padded) and the output tile ~256 KiB.
    batch_tile = max(128, min(int(batch_tile), 8192))
    bt, chunk = _pick_batch_tile(B, batch_tile)
    num_tiles = pl.cdiv(B, bt)  # trailing partial tile handled by Pallas masking

    weights = (w1, w2, w3, w4)
    biases = (b1, b2, b3, b4)
    flops = 2 * B * sum(int(w.shape[0]) * int(w.shape[1]) for w in weights)
    param_bytes = sum(int(a.size) * 4 for a in weights + biases)
    bytes_accessed = B * (in_size + out_size) * 4 + param_bytes
    cost = pl.CostEstimate(flops=flops,
                           transcendentals=2 * B * out_size,  # exp + log1p per output
                           bytes_accessed=bytes_accessed)

    # Weights/biases: full-array blocks, constant index_map -> resident, fetched once.
    def full(arr):
        return pl.BlockSpec(arr.shape, lambda i: (0, 0))

    in_specs = [
        # x batch-major: one contiguous [bt, in] HBM slab per grid step.
        pl.BlockSpec((bt, in_size), lambda i: (i, 0)),
        full(w1), full(b1),
        full(w2), full(b2),
        full(w3), full(b3),
        full(w4), full(b4),
    ]
    # Feature-major output: lane-dense [out_size, bt] stores.
    out_spec = pl.BlockSpec((out_size, bt), lambda i: (0, i))

    outT = pl.pallas_call(
        functools.partial(mlp_kernel, chunk=chunk),
        out_shape=jax.ShapeDtypeStruct((out_size, B), jnp.float32),
        grid_spec=pltpu.PrefetchScalarGridSpec(
            num_scalar_prefetch=0,
            grid=(num_tiles,),
            in_specs=in_specs,
            out_specs=out_spec,
        ),
        compiler_params=pltpu.CompilerParams(
            # independent batch tiles -> megacore-shardable on v7x
            dimension_semantics=("parallel",)),
        cost_estimate=cost,
    )(x, w1, b1, w2, b2, w3, b3, w4, b4)

    # Back to torch-style [B, out_size]; this transpose only touches out_size*4 B/row.
    return jnp.transpose(outT)


def init_params(key, input_size, hidden_sizes, output_size):
    """Deterministic init mimicking torch.nn.Linear default (U[-1/sqrt(fan_in), ...]).

    Weights stored as [out, in] (torch layout), biases as [out, 1].
    """
    dims = [input_size] + list(hidden_sizes) + [output_size]
    params = {}
    for layer_idx in range(4):
        fan_in, fan_out = dims[layer_idx], dims[layer_idx + 1]
        key, kw, kb = jax.random.split(key, 3)
        bound = 1.0 / (fan_in ** 0.5)
        params[f"w{layer_idx + 1}"] = jax.random.uniform(
            kw, (fan_out, fan_in), jnp.float32, -bound, bound)
        params[f"b{layer_idx + 1}"] = jax.random.uniform(
            kb, (fan_out, 1), jnp.float32, -bound, bound)
    return params


def reference_forward(x, params):
    """Plain-JAX reference matching the PyTorch forward exactly."""
    h = x
    for i in (1, 2, 3):
        h = jnp.maximum(h @ params[f"w{i}"].T + params[f"b{i}"][:, 0], 0.0)
    z = h @ params["w4"].T + params["b4"][:, 0]
    return jnp.where(z > 20.0, z, jnp.log1p(jnp.exp(jnp.minimum(z, 20.0))))


if __name__ == "__main__":
    key = jax.random.PRNGKey(0)
    input_size = 16
    hidden_sizes = (32, 64, 32)
    output_size = 8

    kx, kp, kx2 = jax.random.split(key, 3)
    params = init_params(kp, input_size, hidden_sizes, output_size)

    # Aligned batch: 2 grid steps of 128 lanes each.
    batch = 256
    x = jax.random.normal(kx, (batch, input_size), jnp.float32)
    out = jax.block_until_ready(matrix_factorization_net(x, params))
    ref = reference_forward(x, params)
    assert out.shape == (batch, output_size)
    assert jnp.allclose(out, ref, atol=2e-5, rtol=2e-5), "mismatch vs reference"

    # Non-128-multiple batch: exercises the masked trailing partial tile path.
    batch2 = 200
    x2 = jax.random.normal(kx2, (batch2, input_size), jnp.float32)
    out2 = jax.block_until_ready(matrix_factorization_net(x2, params))
    ref2 = reference_forward(x2, params)
    assert out2.shape == (batch2, output_size)
    assert jnp.allclose(out2, ref2, atol=2e-5, rtol=2e-5), "mismatch vs reference (ragged)"

    print("KERNEL_OK")
</pallas_src>

<mosaic_0001>
module attributes {stable_mosaic.version = 11 : i64} {
  func.func @mlp_kernel(%arg0: i32, %arg1: memref<128x16xf32, #tpu.memory_space<vmem>>, %arg2: memref<32x16xf32, #tpu.memory_space<vmem>>, %arg3: memref<32x1xf32, #tpu.memory_space<vmem>>, %arg4: memref<64x32xf32, #tpu.memory_space<vmem>>, %arg5: memref<64x1xf32, #tpu.memory_space<vmem>>, %arg6: memref<32x64xf32, #tpu.memory_space<vmem>>, %arg7: memref<32x1xf32, #tpu.memory_space<vmem>>, %arg8: memref<8x32xf32, #tpu.memory_space<vmem>>, %arg9: memref<8x1xf32, #tpu.memory_space<vmem>>, %arg10: memref<8x128xf32, #tpu.memory_space<vmem>>) attributes {dimension_semantics = [#tpu.dimension_semantics<parallel>], iteration_bounds = array<i64: 2>, scalar_prefetch = 0 : i64, scratch_operands = 0 : i64, tpu.core_type = #tpu.core_type<tc>, window_params = [{transform_indices = @transform_0, window_bounds = array<i64: 128, 16>}, {pipeline_mode = #tpu.pipeline_mode<synchronous>, transform_indices = @transform_1, window_bounds = array<i64: 32, 16>}, {pipeline_mode = #tpu.pipeline_mode<synchronous>, transform_indices = @transform_2, window_bounds = array<i64: 32, 1>}, {pipeline_mode = #tpu.pipeline_mode<synchronous>, transform_indices = @transform_3, window_bounds = array<i64: 64, 32>}, {pipeline_mode = #tpu.pipeline_mode<synchronous>, transform_indices = @transform_4, window_bounds = array<i64: 64, 1>}, {pipeline_mode = #tpu.pipeline_mode<synchronous>, transform_indices = @transform_5, window_bounds = array<i64: 32, 64>}, {pipeline_mode = #tpu.pipeline_mode<synchronous>, transform_indices = @transform_6, window_bounds = array<i64: 32, 1>}, {pipeline_mode = #tpu.pipeline_mode<synchronous>, transform_indices = @transform_7, window_bounds = array<i64: 8, 32>}, {pipeline_mode = #tpu.pipeline_mode<synchronous>, transform_indices = @transform_8, window_bounds = array<i64: 8, 1>}, {transform_indices = @transform_9, window_bounds = array<i64: 8, 128>}]} {
    %c0 = arith.constant 0 : index
    %c0_0 = arith.constant 0 : index
    %0 = vector.load %arg2[%c0, %c0_0] : memref<32x16xf32, #tpu.memory_space<vmem>>, vector<32x16xf32>
    %c0_1 = arith.constant 0 : index
    %c0_2 = arith.constant 0 : index
    %1 = vector.load %arg3[%c0_1, %c0_2] : memref<32x1xf32, #tpu.memory_space<vmem>>, vector<32x1xf32>
    %c0_3 = arith.constant 0 : index
    %c0_4 = arith.constant 0 : index
    %2 = vector.load %arg4[%c0_3, %c0_4] : memref<64x32xf32, #tpu.memory_space<vmem>>, vector<64x32xf32>
    %c0_5 = arith.constant 0 : index
    %c0_6 = arith.constant 0 : index
    %3 = vector.load %arg5[%c0_5, %c0_6] : memref<64x1xf32, #tpu.memory_space<vmem>>, vector<64x1xf32>
    %c0_7 = arith.constant 0 : index
    %c0_8 = arith.constant 0 : index
    %4 = vector.load %arg6[%c0_7, %c0_8] : memref<32x64xf32, #tpu.memory_space<vmem>>, vector<32x64xf32>
    %c0_9 = arith.constant 0 : index
    %c0_10 = arith.constant 0 : index
    %5 = vector.load %arg7[%c0_9, %c0_10] : memref<32x1xf32, #tpu.memory_space<vmem>>, vector<32x1xf32>
    %c0_11 = arith.constant 0 : index
    %c0_12 = arith.constant 0 : index
    %6 = vector.load %arg8[%c0_11, %c0_12] : memref<8x32xf32, #tpu.memory_space<vmem>>, vector<8x32xf32>
    %c0_13 = arith.constant 0 : index
    %c0_14 = arith.constant 0 : index
    %7 = vector.load %arg9[%c0_13, %c0_14] : memref<8x1xf32, #tpu.memory_space<vmem>>, vector<8x1xf32>
    %c0_i32 = arith.constant 0 : i32
    %c128_i32 = arith.constant 128 : i32
    %8 = arith.muli %c0_i32, %c128_i32 : i32
    %9 = tpu.assume_multiple %8, 128 : i32
    %10 = arith.index_cast %9 : i32 to index
    %c0_15 = arith.constant 0 : index
    %11 = vector.load %arg1[%10, %c0_15] : memref<128x16xf32, #tpu.memory_space<vmem>>, vector<128x16xf32>
    %cst = arith.constant dense<0.000000e+00> : vector<32x128xf32>
    %12 = tpu.matmul %0, %11, %cst {dimension_numbers = #tpu.dot_dimension_numbers<[1], [1], [0], [0], [0, 0, 1, 0], [], []>} : vector<32x16xf32>, vector<128x16xf32>, vector<32x128xf32> -> vector<32x128xf32>
    %13 = vector.broadcast %1 : vector<32x1xf32> to vector<32x128xf32>
    %14 = arith.addf %12, %13 : vector<32x128xf32>
    %cst_16 = arith.constant 0.000000e+00 : f32
    %15 = vector.broadcast %cst_16 : f32 to vector<32x128xf32>
    %16 = arith.maximumf %14, %15 : vector<32x128xf32>
    %cst_17 = arith.constant dense<0.000000e+00> : vector<64x128xf32>
    %17 = tpu.matmul %2, %16, %cst_17 {dimension_numbers = #tpu.dot_dimension_numbers<[1], [0], [0], [1], [0, 0, 1, 1], [], []>} : vector<64x32xf32>, vector<32x128xf32>, vector<64x128xf32> -> vector<64x128xf32>
    %18 = vector.broadcast %3 : vector<64x1xf32> to vector<64x128xf32>
    %19 = arith.addf %17, %18 : vector<64x128xf32>
    %cst_18 = arith.constant 0.000000e+00 : f32
    %20 = vector.broadcast %cst_18 : f32 to vector<64x128xf32>
    %21 = arith.maximumf %19, %20 : vector<64x128xf32>
    %cst_19 = arith.constant dense<0.000000e+00> : vector<32x128xf32>
    %22 = tpu.matmul %4, %21, %cst_19 {dimension_numbers = #tpu.dot_dimension_numbers<[1], [0], [0], [1], [0, 0, 1, 1], [], []>} : vector<32x64xf32>, vector<64x128xf32>, vector<32x128xf32> -> vector<32x128xf32>
    %23 = vector.broadcast %5 : vector<32x1xf32> to vector<32x128xf32>
    %24 = arith.addf %22, %23 : vector<32x128xf32>
    %cst_20 = arith.constant 0.000000e+00 : f32
    %25 = vector.broadcast %cst_20 : f32 to vector<32x128xf32>
    %26 = arith.maximumf %24, %25 : vector<32x128xf32>
    %cst_21 = arith.constant dense<0.000000e+00> : vector<8x128xf32>
    %27 = tpu.matmul %6, %26, %cst_21 {dimension_numbers = #tpu.dot_dimension_numbers<[1], [0], [0], [1], [0, 0, 1, 1], [], []>} : vector<8x32xf32>, vector<32x128xf32>, vector<8x128xf32> -> vector<8x128xf32>
    %28 = vector.broadcast %7 : vector<8x1xf32> to vector<8x128xf32>
    %29 = arith.addf %27, %28 : vector<8x128xf32>
    %cst_22 = arith.constant 2.000000e+01 : f32
    %30 = vector.broadcast %cst_22 : f32 to vector<8x128xf32>
    %31 = arith.minimumf %29, %30 : vector<8x128xf32>
    %cst_23 = arith.constant 2.000000e+01 : f32
    %32 = vector.broadcast %cst_23 : f32 to vector<8x128xf32>
    %33 = arith.cmpf ogt, %29, %32 : vector<8x128xf32>
    %34 = math.exp %31 : vector<8x128xf32>
    %35 = math.log1p %34 : vector<8x128xf32>
    %36 = arith.select %33, %29, %35 : vector<8x128xi1>, vector<8x128xf32>
    %c0_24 = arith.constant 0 : index
    %37 = arith.index_cast %9 : i32 to index
    %38 = vector.load %arg10[%c0_24, %37] : memref<8x128xf32, #tpu.memory_space<vmem>>, vector<8x128xf32>
    tpu.vector_store %arg10[%c0_24, %37], %36 {strides = array<i32>} : memref<8x128xf32, #tpu.memory_space<vmem>>, vector<8x128xf32>,
    %c1_i32 = arith.constant 1 : i32
    return
  }
  func.func @transform_0(%arg0: i32) -> (i32, i32) {
    %c0_i32 = arith.constant 0 : i32
    %c0_i32_0 = arith.constant 0 : i32
    return %arg0, %c0_i32 : i32, i32
  }
  func.func @transform_1(%arg0: i32) -> (i32, i32) {
    %c0_i32 = arith.constant 0 : i32
    %c0_i32_0 = arith.constant 0 : i32
    %c0_i32_1 = arith.constant 0 : i32
    return %c0_i32, %c0_i32_0 : i32, i32
  }
  func.func @transform_2(%arg0: i32) -> (i32, i32) {
    %c0_i32 = arith.constant 0 : i32
    %c0_i32_0 = arith.constant 0 : i32
    %c0_i32_1 = arith.constant 0 : i32
    return %c0_i32, %c0_i32_0 : i32, i32
  }
  func.func @transform_3(%arg0: i32) -> (i32, i32) {
    %c0_i32 = arith.constant 0 : i32
    %c0_i32_0 = arith.constant 0 : i32
    %c0_i32_1 = arith.constant 0 : i32
    return %c0_i32, %c0_i32_0 : i32, i32
  }
  func.func @transform_4(%arg0: i32) -> (i32, i32) {
    %c0_i32 = arith.constant 0 : i32
    %c0_i32_0 = arith.constant 0 : i32
    %c0_i32_1 = arith.constant 0 : i32
    return %c0_i32, %c0_i32_0 : i32, i32
  }
  func.func @transform_5(%arg0: i32) -> (i32, i32) {
    %c0_i32 = arith.constant 0 : i32
    %c0_i32_0 = arith.constant 0 : i32
    %c0_i32_1 = arith.constant 0 : i32
    return %c0_i32, %c0_i32_0 : i32, i32
  }
  func.func @transform_6(%arg0: i32) -> (i32, i32) {
    %c0_i32 = arith.constant 0 : i32
    %c0_i32_0 = arith.constant 0 : i32
    %c0_i32_1 = arith.constant 0 : i32
    return %c0_i32, %c0_i32_0 : i32, i32
  }
  func.func @transform_7(%arg0: i32) -> (i32, i32) {
    %c0_i32 = arith.constant 0 : i32
    %c0_i32_0 = arith.constant 0 : i32
    %c0_i32_1 = arith.constant 0 : i32
    return %c0_i32, %c0_i32_0 : i32, i32
  }
  func.func @transform_8(%arg0: i32) -> (i32, i32) {
    %c0_i32 = arith.constant 0 : i32
    %c0_i32_0 = arith.constant 0 : i32
    %c0_i32_1 = arith.constant 0 : i32
    return %c0_i32, %c0_i32_0 : i32, i32
  }
  func.func @transform_9(%arg0: i32) -> (i32, i32) {
    %c0_i32 = arith.constant 0 : i32
    %c0_i32_0 = arith.constant 0 : i32
    return %c0_i32, %arg0 : i32, i32
  }
}

</mosaic_0001>

<llo_original>
// kernel: matrix_factorization_net.1
$region0: #{matrix_factorization_net.1}
  #allocation0 [shape = 'u32[]', space=smem, size = 0x4, offset = 0x4, fixed_abs, tag = 'smem constant byte address 0x4 - core index']
  #allocation1 [shape = 'u32[144,128]{1,0:T(1,128)}', space=vmem, size = 0x12000, scoped, tag = 'internal scratch']
  %s0 = inlined_call_operand.vmem [shape: f32[256,16], index: 0, kind: input, shape index: {}]
  %s1 = inlined_call_operand.vmem [shape: f32[32,16], index: 1, kind: input, shape index: {}]
  %s2 = inlined_call_operand.vmem [shape: f32[32,1], index: 2, kind: input, shape index: {}]
  %s3 = inlined_call_operand.vmem [shape: f32[64,32], index: 3, kind: input, shape index: {}]
  %s4 = inlined_call_operand.vmem [shape: f32[64,1], index: 4, kind: input, shape index: {}]
  %s5 = inlined_call_operand.vmem [shape: f32[32,64], index: 5, kind: input, shape index: {}]
  %s6 = inlined_call_operand.vmem [shape: f32[32,1], index: 6, kind: input, shape index: {}]
  %s7 = inlined_call_operand.vmem [shape: f32[8,32], index: 7, kind: input, shape index: {}]
  %s8 = inlined_call_operand.vmem [shape: f32[8,1], index: 8, kind: input, shape index: {}]
  %s9 = inlined_call_operand.hbm [shape: f32[8,256], index: 9, kind: output, shape index: {}]
  %s10 = sld [smem:[#allocation0]]
  $region69: #{matrix_factorization_net.1} parent=0
    _
  %s12 = ssub.s32 1, %s10
  %s13 = scalar_select 0, %s12, %s10
  $region1: #{matrix_factorization_net.1} parent=0
    #allocation2 [shape = 'u8[8192]{0}', space=vmem, size = 0x2000, scoped, tag = 'output window, operand 0']
    #allocation3 [shape = 's32[2]{0}', space=sflag, size = 0x8, scoped, tag = 'scoped memory for matrix_factorization_net.1']
    %14 = vsyncpa [#allocation3], 0
    %s15 = scalar_lea.sflag [#allocation3], 1
    %16 = vsyncpa %s15, 0
    loop: start=0, step=1, limit=4
    $region2: #{matrix_factorization_net.1} parent=1 // loop_pre_header
      _
    $region3: #{matrix_factorization_net.1} parent=1 // loop_header
      %s18 = sphi 0, %s22
      %p19 = scmp.ge.s32.totalorder %s18, 4
      %s28 = sphi 0, %s30
      %s31 = sphi 0, %s28
      %s32 = sphi 0, %s31
      %s48 = sphi 0, %s32
      %s52 = sphi 0, %s52
      %s54 = sphi 0, %s52
      %s55 = sphi 0, %s54
      %s69 = sphi 0, %s55
      %s73 = sphi 0, %s73
      %s75 = sphi 0, %s73
      %s76 = sphi 0, %s75
      %s90 = sphi 0, %s76
      %s94 = sphi 0, %s94
      %s96 = sphi 0, %s94
      %s97 = sphi 0, %s96
      %s111 = sphi 0, %s97
      %s115 = sphi 0, %s115
      %s117 = sphi 0, %s115
      %s118 = sphi 0, %s117
      %s132 = sphi 0, %s118
      %s136 = sphi 0, %s136
      %s138 = sphi 0, %s136
      %s139 = sphi 0, %s138
      %s153 = sphi 0, %s139
      %s157 = sphi 0, %s157
      %s159 = sphi 0, %s157
      %s160 = sphi 0, %s159
      %s174 = sphi 0, %s160
      %s178 = sphi 0, %s178
      %s180 = sphi 0, %s178
      %s181 = sphi 0, %s180
      %s195 = sphi 0, %s181
      %s199 = sphi 0, %s199
      %s201 = sphi 0, %s199
      %s202 = sphi 0, %s201
      %s216 = sphi 0, %s202
      %s222 = sphi 0, %s224
      %s225 = sphi 0, %s222
      %s226 = sphi 0, %s225
      %s242 = sphi 0, %s226
    $region4: #{matrix_factorization_net.1} parent=1 // loop_header_branch
      %21 = sbr.rel (%p19) target = $region8
    $region5: #{matrix_factorization_net.1} parent=1 // loop_body
      %s23 = ssub.s32 %s18, 1
      %s24 = ssub.s32 %s18, 2
      %s25 = sadd.s32 %s18, 1
      %s26 = ssub.s32 %s18, %s25
      %p27 = scmp.eq.s32.totalorder %s26, 0
      %s29 = sadd.s32 %s28, 1
      %s30 = scalar_select %p27, %s28, %s29
      %p33 = pneg %p27
      %p34 = scmp.eq.s32.totalorder %s18, 1
      %p35 = por %p33, %p34
      %p36 = scmp.ne.s32.totalorder %s28, %s31
      %p37 = scmp.eq.s32.totalorder %s18, 0
      %p38 = por %p36, %p37
      %p39 = scmp.ne.s32.totalorder %s28, %s31
      %p40 = scmp.eq.s32.totalorder %s23, 1
      %p41 = por %p39, %p40
      %p42 = scmp.ne.s32.totalorder %s31, %s32
      %p43 = scmp.eq.s32.totalorder %s23, 0
      %p44 = por %p42, %p43
      %p45 = scmp.ne.s32.totalorder %s31, %s32
      %p46 = scmp.eq.s32.totalorder %s24, 1
      %p47 = por %p45, %p46
      %p49 = scmp.ne.s32.totalorder %s32, %s48
      %p50 = scmp.eq.s32.totalorder %s24, 0
      %p51 = por %p49, %p50
      %s53 = sadd.s32 %s52, 1
      %p56 = scmp.eq.s32.totalorder %s18, 1
      %p57 = scmp.ne.s32.totalorder %s52, %s54
      %p58 = scmp.eq.s32.totalorder %s18, 0
      %p59 = por %p57, %p58
      %p60 = scmp.ne.s32.totalorder %s52, %s54
      %p61 = scmp.eq.s32.totalorder %s23, 1
      %p62 = por %p60, %p61
      %p63 = scmp.ne.s32.totalorder %s54, %s55
      %p64 = scmp.eq.s32.totalorder %s23, 0
      %p65 = por %p63, %p64
      %p66 = scmp.ne.s32.totalorder %s54, %s55
      %p67 = scmp.eq.s32.totalorder %s24, 1
      %p68 = por %p66, %p67
      %p70 = scmp.ne.s32.totalorder %s55, %s69
      %p71 = scmp.eq.s32.totalorder %s24, 0
      %p72 = por %p70, %p71
      %s74 = sadd.s32 %s73, 1
      %p77 = scmp.eq.s32.totalorder %s18, 1
      %p78 = scmp.ne.s32.totalorder %s73, %s75
      %p79 = scmp.eq.s32.totalorder %s18, 0
      %p80 = por %p78, %p79
      %p81 = scmp.ne.s32.totalorder %s73, %s75
      %p82 = scmp.eq.s32.totalorder %s23, 1
      %p83 = por %p81, %p82
      %p84 = scmp.ne.s32.totalorder %s75, %s76
      %p85 = scmp.eq.s32.totalorder %s23, 0
      %p86 = por %p84, %p85
      %p87 = scmp.ne.s32.totalorder %s75, %s76
      %p88 = scmp.eq.s32.totalorder %s24, 1
      %p89 = por %p87, %p88
      %p91 = scmp.ne.s32.totalorder %s76, %s90
      %p92 = scmp.eq.s32.totalorder %s24, 0
      %p93 = por %p91, %p92
      %s95 = sadd.s32 %s94, 1
      %p98 = scmp.eq.s32.totalorder %s18, 1
      %p99 = scmp.ne.s32.totalorder %s94, %s96
      %p100 = scmp.eq.s32.totalorder %s18, 0
      %p101 = por %p99, %p100
      %p102 = scmp.ne.s32.totalorder %s94, %s96
      %p103 = scmp.eq.s32.totalorder %s23, 1
      %p104 = por %p102, %p103
      %p105 = scmp.ne.s32.totalorder %s96, %s97
      %p106 = scmp.eq.s32.totalorder %s23, 0
      %p107 = por %p105, %p106
      %p108 = scmp.ne.s32.totalorder %s96, %s97
      %p109 = scmp.eq.s32.totalorder %s24, 1
      %p110 = por %p108, %p109
      %p112 = scmp.ne.s32.totalorder %s97, %s111
      %p113 = scmp.eq.s32.totalorder %s24, 0
      %p114 = por %p112, %p113
      %s116 = sadd.s32 %s115, 1
      %p119 = scmp.eq.s32.totalorder %s18, 1
      %p120 = scmp.ne.s32.totalorder %s115, %s117
      %p121 = scmp.eq.s32.totalorder %s18, 0
      %p122 = por %p120, %p121
      %p123 = scmp.ne.s32.totalorder %s115, %s117
      %p124 = scmp.eq.s32.totalorder %s23, 1
      %p125 = por %p123, %p124
      %p126 = scmp.ne.s32.totalorder %s117, %s118
      %p127 = scmp.eq.s32.totalorder %s23, 0
      %p128 = por %p126, %p127
      %p129 = scmp.ne.s32.totalorder %s117, %s118
      %p130 = scmp.eq.s32.totalorder %s24, 1
      %p131 = por %p129, %p130
      %p133 = scmp.ne.s32.totalorder %s118, %s132
      %p134 = scmp.eq.s32.totalorder %s24, 0
      %p135 = por %p133, %p134
      %s137 = sadd.s32 %s136, 1
      %p140 = scmp.eq.s32.totalorder %s18, 1
      %p141 = scmp.ne.s32.totalorder %s136, %s138
      %p142 = scmp.eq.s32.totalorder %s18, 0
      %p143 = por %p141, %p142
      %p144 = scmp.ne.s32.totalorder %s136, %s138
      %p145 = scmp.eq.s32.totalorder %s23, 1
      %p146 = por %p144, %p145
      %p147 = scmp.ne.s32.totalorder %s138, %s139
      %p148 = scmp.eq.s32.totalorder %s23, 0
      %p149 = por %p147, %p148
      %p150 = scmp.ne.s32.totalorder %s138, %s139
      %p151 = scmp.eq.s32.totalorder %s24, 1
      %p152 = por %p150, %p151
      %p154 = scmp.ne.s32.totalorder %s139, %s153
      %p155 = scmp.eq.s32.totalorder %s24, 0
      %p156 = por %p154, %p155
      %s158 = sadd.s32 %s157, 1
      %p161 = scmp.eq.s32.totalorder %s18, 1
      %p162 = scmp.ne.s32.totalorder %s157, %s159
      %p163 = scmp.eq.s32.totalorder %s18, 0
      %p164 = por %p162, %p163
      %p165 = scmp.ne.s32.totalorder %s157, %s159
      %p166 = scmp.eq.s32.totalorder %s23, 1
      %p167 = por %p165, %p166
      %p168 = scmp.ne.s32.totalorder %s159, %s160
      %p169 = scmp.eq.s32.totalorder %s23, 0
      %p170 = por %p168, %p169
      %p171 = scmp.ne.s32.totalorder %s159, %s160
      %p172 = scmp.eq.s32.totalorder %s24, 1
      %p173 = por %p171, %p172
      %p175 = scmp.ne.s32.totalorder %s160, %s174
      %p176 = scmp.eq.s32.totalorder %s24, 0
      %p177 = por %p175, %p176
      %s179 = sadd.s32 %s178, 1
      %p182 = scmp.eq.s32.totalorder %s18, 1
      %p183 = scmp.ne.s32.totalorder %s178, %s180
      %p184 = scmp.eq.s32.totalorder %s18, 0
      %p185 = por %p183, %p184
      %p186 = scmp.ne.s32.totalorder %s178, %s180
      %p187 = scmp.eq.s32.totalorder %s23, 1
      %p188 = por %p186, %p187
      %p189 = scmp.ne.s32.totalorder %s180, %s181
      %p190 = scmp.eq.s32.totalorder %s23, 0
      %p191 = por %p189, %p190
      %p192 = scmp.ne.s32.totalorder %s180, %s181
      %p193 = scmp.eq.s32.totalorder %s24, 1
      %p194 = por %p192, %p193
      %p196 = scmp.ne.s32.totalorder %s181, %s195
      %p197 = scmp.eq.s32.totalorder %s24, 0
      %p198 = por %p196, %p197
      %s200 = sadd.s32 %s199, 1
      %p203 = scmp.eq.s32.totalorder %s18, 1
      %p204 = scmp.ne.s32.totalorder %s199, %s201
      %p205 = scmp.eq.s32.totalorder %s18, 0
      %p206 = por %p204, %p205
      %p207 = scmp.ne.s32.totalorder %s199, %s201
      %p208 = scmp.eq.s32.totalorder %s23, 1
      %p209 = por %p207, %p208
      %p210 = scmp.ne.s32.totalorder %s201, %s202
      %p211 = scmp.eq.s32.totalorder %s23, 0
      %p212 = por %p210, %p211
      %p213 = scmp.ne.s32.totalorder %s201, %s202
      %p214 = scmp.eq.s32.totalorder %s24, 1
      %p215 = por %p213, %p214
      %p217 = scmp.ne.s32.totalorder %s202, %s216
      %p218 = scmp.eq.s32.totalorder %s24, 0
      %p219 = por %p217, %p218
      %s220 = ssub.s32 %s18, %s25
      %p221 = scmp.eq.s32.totalorder %s220, 0
      %s223 = sadd.s32 %s222, 1
      %s224 = scalar_select %p221, %s222, %s223
      %p227 = pneg %p221
      %p228 = scmp.eq.s32.totalorder %s18, 1
      %p229 = por %p227, %p228
      %p230 = scmp.ne.s32.totalorder %s222, %s225
      %p231 = scmp.eq.s32.totalorder %s18, 0
      %p232 = por %p230, %p231
      %p233 = scmp.ne.s32.totalorder %s222, %s225
      %p234 = scmp.eq.s32.totalorder %s23, 1
      %p235 = por %p233, %p234
      %p236 = scmp.ne.s32.totalorder %s225, %s226
      %p237 = scmp.eq.s32.totalorder %s23, 0
      %p238 = por %p236, %p237
      %p239 = scmp.ne.s32.totalorder %s225, %s226
      %p240 = scmp.eq.s32.totalorder %s24, 1
      %p241 = por %p239, %p240
      %p243 = scmp.ne.s32.totalorder %s226, %s242
      %p244 = scmp.eq.s32.totalorder %s24, 0
      %p245 = por %p243, %p244
      %p246 = scmp.le.s32.totalorder 1, %s18
      %p247 = scmp.lt.s32.totalorder %s18, 3
      %p248 = pnand %p246, %p247
      %p249 = pneg %p248
      // Predicated region
      $region9: #{matrix_factorization_net.1} parent=5 // pred_check
        _
      $region10: #{matrix_factorization_net.1} parent=5 // pred_check_branch
        %251 = sbr.rel (%p248) target = $region12
      $region11: #{matrix_factorization_net.1} parent=5 // pred_region
        %s252 = ssub.s32 %s18, 1
        // Predicated region
        $region13: #{matrix_factorization_net.1} parent=11 // pred_check
          %p253 = pneg %p65
        $region14: #{matrix_factorization_net.1} parent=11 // pred_check_branch
          %255 = sbr.rel (%p253) target = $region16
        $region15: #{matrix_factorization_net.1} parent=11 // pred_region
          _
        $region16: #{matrix_factorization_net.1} parent=11 // pred_fallthru
          _
        // Predicated region
        $region17: #{matrix_factorization_net.1} parent=11 // pred_check
          %p256 = pneg %p86
        $region18: #{matrix_factorization_net.1} parent=11 // pred_check_branch
          %258 = sbr.rel (%p256) target = $region20
        $region19: #{matrix_factorization_net.1} parent=11 // pred_region
          _
        $region20: #{matrix_factorization_net.1} parent=11 // pred_fallthru
          _
        // Predicated region
        $region21: #{matrix_factorization_net.1} parent=11 // pred_check
          %p259 = pneg %p107
        $region22: #{matrix_factorization_net.1} parent=11 // pred_check_branch
          %261 = sbr.rel (%p259) target = $region24
        $region23: #{matrix_factorization_net.1} parent=11 // pred_region
          _
        $region24: #{matrix_factorization_net.1} parent=11 // pred_fallthru
          _
        // Predicated region
        $region25: #{matrix_factorization_net.1} parent=11 // pred_check
          %p262 = pneg %p128
        $region26: #{matrix_factorization_net.1} parent=11 // pred_check_branch
          %264 = sbr.rel (%p262) target = $region28
        $region27: #{matrix_factorization_net.1} parent=11 // pred_region
          _
        $region28: #{matrix_factorization_net.1} parent=11 // pred_fallthru
          _
        // Predicated region
        $region29: #{matrix_factorization_net.1} parent=11 // pred_check
          %p265 = pneg %p149
        $region30: #{matrix_factorization_net.1} parent=11 // pred_check_branch
          %267 = sbr.rel (%p265) target = $region32
        $region31: #{matrix_factorization_net.1} parent=11 // pred_region
          _
        $region32: #{matrix_factorization_net.1} parent=11 // pred_fallthru
          _
        // Predicated region
        $region33: #{matrix_factorization_net.1} parent=11 // pred_check
          %p268 = pneg %p170
        $region34: #{matrix_factorization_net.1} parent=11 // pred_check_branch
          %270 = sbr.rel (%p268) target = $region36
        $region35: #{matrix_factorization_net.1} parent=11 // pred_region
          _
        $region36: #{matrix_factorization_net.1} parent=11 // pred_fallthru
          _
        // Predicated region
        $region37: #{matrix_factorization_net.1} parent=11 // pred_check
          %p271 = pneg %p191
        $region38: #{matrix_factorization_net.1} parent=11 // pred_check_branch
          %273 = sbr.rel (%p271) target = $region40
        $region39: #{matrix_factorization_net.1} parent=11 // pred_region
          _
        $region40: #{matrix_factorization_net.1} parent=11 // pred_fallthru
          _
        // Predicated region
        $region41: #{matrix_factorization_net.1} parent=11 // pred_check
          %p274 = pneg %p212
        $region42: #{matrix_factorization_net.1} parent=11 // pred_check_branch
          %276 = sbr.rel (%p274) target = $region44
        $region43: #{matrix_factorization_net.1} parent=11 // pred_region
          _
        $region44: #{matrix_factorization_net.1} parent=11 // pred_fallthru
          _
      $region12: #{matrix_factorization_net.1} parent=5 // pred_fallthru
        _
      %p277 = scmp.lt.s32.totalorder %s18, 2
      // Predicated region
      $region45: #{matrix_factorization_net.1} parent=5 // pred_check
        %p278 = pneg %p277
      $region46: #{matrix_factorization_net.1} parent=5 // pred_check_branch
        %280 = sbr.rel (%p278) target = $region48
      $region47: #{matrix_factorization_net.1} parent=5 // pred_region
        // Predicated region
        $region49: #{matrix_factorization_net.1} parent=47 // pred_check
          %p281 = pneg %p38
        $region50: #{matrix_factorization_net.1} parent=47 // pred_check_branch
          %283 = sbr.rel (%p281) target = $region52
        $region51: #{matrix_factorization_net.1} parent=47 // pred_region
          %s284 = smul.u32 16, %s18
          %p285 = scmp.lt.s32.totalorder %s284, 31
          %s286 = scalar_select %p285, %s284, 31
          %s287 = smul.addr %s286, 8
          %s288 = scalar_lea.vmem %s0, %s287
          %s289 = smul.u32 16, %s18
        $region52: #{matrix_factorization_net.1} parent=47 // pred_fallthru
          _
      $region48: #{matrix_factorization_net.1} parent=5 // pred_fallthru
        _
      %p290 = scmp.le.s32.totalorder 1, %s18
      %p291 = scmp.lt.s32.totalorder %s18, 3
      %p292 = pnand %p290, %p291
      %p293 = pneg %p292
      // Predicated region
      $region53: #{matrix_factorization_net.1} parent=5 // pred_check
        _
      $region54: #{matrix_factorization_net.1} parent=5 // pred_check_branch
        %295 = sbr.rel (%p292) target = $region56
      $region55: #{matrix_factorization_net.1} parent=5 // pred_region
        %s296 = ssub.s32 %s18, 1
        %s297 = smul.u32 16, %s23
        %p298 = scmp.lt.s32.totalorder %s297, 31
        %s299 = scalar_select %p298, %s297, 31
        %s300 = smul.addr %s299, 8
        %s301 = scalar_lea.vmem %s0, %s300
        %p302 = pneg %p44
        %p303 = pneg %p41
        %p304 = pneg %p65
        %p305 = pneg %p62
        %p306 = pneg %p86
        %p307 = pneg %p83
        %p308 = pneg %p107
        %p309 = pneg %p104
        %p310 = pneg %p128
        %p311 = pneg %p125
        %p312 = pneg %p149
        %p313 = pneg %p146
        %p314 = pneg %p170
        %p315 = pneg %p167
        %p316 = pneg %p191
        %p317 = pneg %p188
        %p318 = pneg %p212
        %p319 = pneg %p209
        %p320 = pneg %p238
        %p321 = pneg %p235
        %s322 = sand.u32 %s225, 1
        %s323 = scalar_lea.sflag [#allocation3], %s322
        %s324 = sand.u32 %s225, 1
        %s325 = smul.addr %s324, 8
        %s326 = scalar_lea.vmem [#allocation2], %s325
        %s327 = smul.u32 16, %s23
        %p328 = scmp.lt.s32.totalorder %s327, 31
        %s329 = scalar_select %p328, %s327, 31
        %s330 = smul.addr %s329, 8
        %s331 = scalar_lea.vmem %s0, %s330
        %s332 = smul.u32 16, %s23
        %v333 = vld [vmem:[%s1] sm:$0xff]
        %v334 = vld [vmem:[%s1 + $0x8] sm:$0xff]
        %v335 = vld [vmem:[%s1 + $0x10] sm:$0xff]
        %v336 = vld [vmem:[%s1 + $0x18] sm:$0xff]
        %v337 = vld [vmem:[%s2] sm:$0xff]
        %v338 = vld [vmem:[%s2 + $0x8] sm:$0xff]
        %v339 = vld [vmem:[%s2 + $0x10] sm:$0xff]
        %v340 = vld [vmem:[%s2 + $0x18] sm:$0xff]
        %v341 = vld [vmem:[%s3] sm:$0xff]
        %v342 = vld [vmem:[%s3 + $0x8] sm:$0xff]
        %v343 = vld [vmem:[%s3 + $0x10] sm:$0xff]
        %v344 = vld [vmem:[%s3 + $0x18] sm:$0xff]
        %v345 = vld [vmem:[%s3 + $0x20] sm:$0xff]
        %v346 = vld [vmem:[%s3 + $0x28] sm:$0xff]
        %v347 = vld [vmem:[%s3 + $0x30] sm:$0xff]
        %v348 = vld [vmem:[%s3 + $0x38] sm:$0xff]
        %v349 = vld [vmem:[%s4] sm:$0xff]
        %v350 = vld [vmem:[%s4 + $0x8] sm:$0xff]
        %v351 = vld [vmem:[%s4 + $0x10] sm:$0xff]
        %v352 = vld [vmem:[%s4 + $0x18] sm:$0xff]
        %v353 = vld [vmem:[%s4 + $0x20] sm:$0xff]
        %v354 = vld [vmem:[%s4 + $0x28] sm:$0xff]
        %v355 = vld [vmem:[%s4 + $0x30] sm:$0xff]
        %v356 = vld [vmem:[%s4 + $0x38] sm:$0xff]
        %v357 = vld [vmem:[%s5] sm:$0xff]
        %v358 = vld [vmem:[%s5 + $0x8] sm:$0xff]
        %v359 = vld [vmem:[%s5 + $0x10] sm:$0xff]
        %v360 = vld [vmem:[%s5 + $0x18] sm:$0xff]
        %v361 = vld [vmem:[%s6] sm:$0xff]
        %v362 = vld [vmem:[%s6 + $0x8] sm:$0xff]
        %v363 = vld [vmem:[%s6 + $0x10] sm:$0xff]
        %v364 = vld [vmem:[%s6 + $0x18] sm:$0xff]
        %v365 = vld [vmem:[%s7] sm:$0xff]
        %v366 = vld [vmem:[%s8] sm:$0xff]
        %v367 = vld [vmem:[%s331] sm:$0xff]
        %v368 = vld [vmem:[%s331 + $0x8] sm:$0xff]
        %v369 = vld [vmem:[%s331 + $0x10] sm:$0xff]
        %v370 = vld [vmem:[%s331 + $0x18] sm:$0xff]
        %v371 = vld [vmem:[%s331 + $0x20] sm:$0xff]
        %v372 = vld [vmem:[%s331 + $0x28] sm:$0xff]
        %v373 = vld [vmem:[%s331 + $0x30] sm:$0xff]
        %v374 = vld [vmem:[%s331 + $0x38] sm:$0xff]
        %v375 = vld [vmem:[%s331 + $0x40] sm:$0xff]
        %v376 = vld [vmem:[%s331 + $0x48] sm:$0xff]
        %v377 = vld [vmem:[%s331 + $0x50] sm:$0xff]
        %v378 = vld [vmem:[%s331 + $0x58] sm:$0xff]
        %v379 = vld [vmem:[%s331 + $0x60] sm:$0xff]
        %v380 = vld [vmem:[%s331 + $0x68] sm:$0xff]
        %v381 = vld [vmem:[%s331 + $0x70] sm:$0xff]
        %v382 = vld [vmem:[%s331 + $0x78] sm:$0xff]
        %384 = vset.pattern.permute.xlu0 0
        %385 = vperm.xlu0 %384, %v337
        %v386 = vpop.permute.xlu0 %385
        %389 = vset.pattern.permute.xlu0 0
        %390 = vperm.xlu0 %389, %v338
        %v391 = vpop.permute.xlu0 %390
        %394 = vset.pattern.permute.xlu0 0
        %395 = vperm.xlu0 %394, %v339
        %v396 = vpop.permute.xlu0 %395
        %399 = vset.pattern.permute.xlu0 0
        %400 = vperm.xlu0 %399, %v340
        %v401 = vpop.permute.xlu0 %400
        %vm403 = vcmask 130048
        %v405 = vsel %vm403, %v333, 0
        %v408 = vsel %vm403, %v334, 0
        %v411 = vsel %vm403, %v335, 0
        %v414 = vsel %vm403, %v336, 0
        %v417 = vsel %vm403, %v367, 0
        %v420 = vsel %vm403, %v368, 0
        %v423 = vsel %vm403, %v369, 0
        %v426 = vsel %vm403, %v370, 0
        %v429 = vsel %vm403, %v371, 0
        %v432 = vsel %vm403, %v372, 0
        %v435 = vsel %vm403, %v373, 0
        %v438 = vsel %vm403, %v374, 0
        %v441 = vsel %vm403, %v375, 0
        %v444 = vsel %vm403, %v376, 0
        %v447 = vsel %vm403, %v377, 0
        %v450 = vsel %vm403, %v378, 0
        %v453 = vsel %vm403, %v379, 0
        %v456 = vsel %vm403, %v380, 0
        %v459 = vsel %vm403, %v381, 0
        %v462 = vsel %vm403, %v382, 0
        %464 = vmatprep.subr.mxu0 0.0
        %465 = vmatpush1.xpose.msra.mxu0 %v417
        %466 = vmatprep.subr.mxu0 0.0
        %467 = vmatpush1.xpose.msra.mxu0 %v420
        %468 = vmatprep.subr.mxu0 0.0
        %469 = vmatpush1.xpose.msra.mxu0 %v423
        %470 = vmatprep.subr.mxu0 0.0
        %471 = vmatpush1.xpose.msra.mxu0 %v426
        %472 = vmatprep.subr.mxu0 0.0
        %473 = vmatpush1.xpose.msra.mxu0 %v429
        %474 = vmatprep.subr.mxu0 0.0
        %475 = vmatpush1.xpose.msra.mxu0 %v432
        %476 = vmatprep.subr.mxu0 0.0
        %477 = vmatpush1.xpose.msra.mxu0 %v435
        %478 = vmatprep.subr.mxu0 0.0
        %479 = vmatpush1.xpose.msra.mxu0 %v438
        %480 = vmatprep.subr.mxu0 0.0
        %481 = vmatpush1.xpose.msra.mxu0 %v441
        %482 = vmatprep.subr.mxu0 0.0
        %483 = vmatpush1.xpose.msra.mxu0 %v444
        %484 = vmatprep.subr.mxu0 0.0
        %485 = vmatpush1.xpose.msra.mxu0 %v447
        %486 = vmatprep.subr.mxu0 0.0
        %487 = vmatpush1.xpose.msra.mxu0 %v450
        %488 = vmatprep.subr.mxu0 0.0
        %489 = vmatpush1.xpose.msra.mxu0 %v453
        %490 = vmatprep.subr.mxu0 0.0
        %491 = vmatpush1.xpose.msra.mxu0 %v456
        %492 = vmatprep.subr.mxu0 0.0
        %493 = vmatpush1.xpose.msra.mxu0 %v459
        %494 = vmatprep.subr.mxu0 0.0
        %495 = vmatpush1.xpose.msra.mxu0 %v462
        %496 = vmatprep.subr.mxu0 0.0
        %497 = vmatpush1.xpose.msra.mxu0 0.0
        %498 = vmatprep.subr.mxu0 0.0
        %499 = vmatpush1.xpose.msra.mxu0 0.0
        %500 = vmatprep.subr.mxu0 0.0
        %501 = vmatpush1.xpose.msra.mxu0 0.0
        %502 = vmatprep.subr.mxu0 0.0
        %503 = vmatpush1.xpose.msra.mxu0 0.0
        %504 = vmatprep.subr.mxu0 0.0
        %505 = vmatpush1.xpose.msra.mxu0 0.0
        %506 = vmatprep.subr.mxu0 0.0
        %507 = vmatpush1.xpose.msra.mxu0 0.0
        %508 = vmatprep.subr.mxu0 0.0
        %509 = vmatpush1.xpose.msra.mxu0 0.0
        %510 = vmatprep.subr.mxu0 0.0
        %511 = vmatpush1.xpose.msra.mxu0 0.0
        %512 = vmatprep.subr.mxu0 0.0
        %513 = vmatpush1.xpose.msra.mxu0 0.0
        %514 = vmatprep.subr.mxu0 0.0
        %515 = vmatpush1.xpose.msra.mxu0 0.0
        %516 = vmatprep.subr.mxu0 0.0
        %517 = vmatpush1.xpose.msra.mxu0 0.0
        %518 = vmatprep.subr.mxu0 0.0
        %519 = vmatpush1.xpose.msra.mxu0 0.0
        %520 = vmatprep.subr.mxu0 0.0
        %521 = vmatpush1.xpose.msra.mxu0 0.0
        %522 = vmatprep.subr.mxu0 0.0
        %523 = vmatpush1.xpose.msra.mxu0 0.0
        %524 = vmatprep.subr.mxu0 0.0
        %525 = vmatpush1.xpose.msra.mxu0 0.0
        %526 = vmatprep.subr.mxu0 0.0
        %527 = vmatpush1.xpose.msra.mxu0 0.0
        %528 = vmatprep.mubr.f32.mxu0 0.0
        %529 = vmatmul.mubr.f32.gmra.mrb[0].mxu0 %v405
        %v530 = vpop.f32.mrb[0].mxu0
        %v531 = vadd.f32 %v386, %v530
        %v532 = vpop.f32.mrb[0].mxu0
        %533 = vmatprep.mubr.f32.mxu0 0.0
        %534 = vmatmul.mubr.f32.gmra.mrb[0].mxu0 %v408
        %v535 = vpop.f32.mrb[0].mxu0
        %v536 = vadd.f32 %v391, %v535
        %v537 = vpop.f32.mrb[0].mxu0
        %538 = vmatprep.mubr.f32.mxu0 0.0
        %539 = vmatmul.mubr.f32.gmra.mrb[0].mxu0 %v411
        %v540 = vpop.f32.mrb[0].mxu0
        %v541 = vadd.f32 %v396, %v540
        %v542 = vpop.f32.mrb[0].mxu0
        %543 = vmatprep.mubr.f32.mxu0 0.0
        %544 = vmatmul.mubr.f32.gmra.mrb[0].mxu0 %v414
        %v545 = vpop.f32.mrb[0].mxu0
        %v546 = vadd.f32 %v401, %v545
        %v547 = vpop.f32.mrb[0].mxu0
        %548 = vdwg.mxu0
        %v549 = vmax.f32 %v531, 0.0
        %v550 = vmax.f32 %v536, 0.0
        %v551 = vmax.f32 %v541, 0.0
        %v552 = vmax.f32 %v546, 0.0
        %554 = vset.pattern.permute.xlu0 0
        %555 = vperm.xlu0 %554, %v349
        %v556 = vpop.permute.xlu0 %555
        %559 = vset.pattern.permute.xlu0 0
        %560 = vperm.xlu0 %559, %v350
        %v561 = vpop.permute.xlu0 %560
        %564 = vset.pattern.permute.xlu0 0
        %565 = vperm.xlu0 %564, %v351
        %v566 = vpop.permute.xlu0 %565
        %569 = vset.pattern.permute.xlu0 0
        %570 = vperm.xlu0 %569, %v352
        %v571 = vpop.permute.xlu0 %570
        %574 = vset.pattern.permute.xlu0 0
        %575 = vperm.xlu0 %574, %v353
        %v576 = vpop.permute.xlu0 %575
        %579 = vset.pattern.permute.xlu0 0
        %580 = vperm.xlu0 %579, %v354
        %v581 = vpop.permute.xlu0 %580
        %584 = vset.pattern.permute.xlu0 0
        %585 = vperm.xlu0 %584, %v355
        %v586 = vpop.permute.xlu0 %585
        %589 = vset.pattern.permute.xlu0 0
        %590 = vperm.xlu0 %589, %v356
        %v591 = vpop.permute.xlu0 %590
        %vm593 = vcmask 261120
        %v595 = vsel %vm593, %v341, 0
        %v598 = vsel %vm593, %v342, 0
        %v601 = vsel %vm593, %v343, 0
        %v604 = vsel %vm593, %v344, 0
        %v607 = vsel %vm593, %v345, 0
        %v610 = vsel %vm593, %v346, 0
        %v613 = vsel %vm593, %v347, 0
        %v616 = vsel %vm593, %v348, 0
        %618 = vmatprep.subr.mxu0 0.0
        %619 = vmatpush1.msra.mxu0 %v549
        %620 = vmatprep.subr.mxu0 0.0
        %621 = vmatpush1.msra.mxu0 %v550
        %622 = vmatprep.subr.mxu0 0.0
        %623 = vmatpush1.msra.mxu0 %v551
        %624 = vmatprep.subr.mxu0 0.0
        %625 = vmatpush1.msra.mxu0 %v552
        %626 = vmatprep.subr.mxu0 0.0
        %627 = vmatpush1.msra.mxu0 0.0
        %628 = vmatprep.subr.mxu0 0.0
        %629 = vmatpush1.msra.mxu0 0.0
        %630 = vmatprep.subr.mxu0 0.0
        %631 = vmatpush1.msra.mxu0 0.0
        %632 = vmatprep.subr.mxu0 0.0
        %633 = vmatpush1.msra.mxu0 0.0
        %634 = vmatprep.subr.mxu0 0.0
        %635 = vmatpush1.msra.mxu0 0.0
        %636 = vmatprep.subr.mxu0 0.0
        %637 = vmatpush1.msra.mxu0 0.0
        %638 = vmatprep.subr.mxu0 0.0
        %639 = vmatpush1.msra.mxu0 0.0
        %640 = vmatprep.subr.mxu0 0.0
        %641 = vmatpush1.msra.mxu0 0.0
        %642 = vmatprep.subr.mxu0 0.0
        %643 = vmatpush1.msra.mxu0 0.0
        %644 = vmatprep.subr.mxu0 0.0
        %645 = vmatpush1.msra.mxu0 0.0
        %646 = vmatprep.subr.mxu0 0.0
        %647 = vmatpush1.msra.mxu0 0.0
        %648 = vmatprep.subr.mxu0 0.0
        %649 = vmatpush1.msra.mxu0 0.0
        %650 = vmatprep.subr.mxu0 0.0
        %651 = vmatpush1.msra.mxu0 0.0
        %652 = vmatprep.subr.mxu0 0.0
        %653 = vmatpush1.msra.mxu0 0.0
        %654 = vmatprep.subr.mxu0 0.0
        %655 = vmatpush1.msra.mxu0 0.0
        %656 = vmatprep.subr.mxu0 0.0
        %657 = vmatpush1.msra.mxu0 0.0
        %658 = vmatprep.subr.mxu0 0.0
        %659 = vmatpush1.msra.mxu0 0.0
        %660 = vmatprep.subr.mxu0 0.0
        %661 = vmatpush1.msra.mxu0 0.0
        %662 = vmatprep.subr.mxu0 0.0
        %663 = vmatpush1.msra.mxu0 0.0
        %664 = vmatprep.subr.mxu0 0.0
        %665 = vmatpush1.msra.mxu0 0.0
        %666 = vmatprep.subr.mxu0 0.0
        %667 = vmatpush1.msra.mxu0 0.0
        %668 = vmatprep.subr.mxu0 0.0
        %669 = vmatpush1.msra.mxu0 0.0
        %670 = vmatprep.subr.mxu0 0.0
        %671 = vmatpush1.msra.mxu0 0.0
        %672 = vmatprep.subr.mxu0 0.0
        %673 = vmatpush1.msra.mxu0 0.0
        %674 = vmatprep.subr.mxu0 0.0
        %675 = vmatpush1.msra.mxu0 0.0
        %676 = vmatprep.subr.mxu0 0.0
        %677 = vmatpush1.msra.mxu0 0.0
        %678 = vmatprep.subr.mxu0 0.0
        %679 = vmatpush1.msra.mxu0 0.0
        %680 = vmatprep.subr.mxu0 0.0
        %681 = vmatpush1.msra.mxu0 0.0
        %682 = vmatprep.mubr.f32.mxu0 0.0
        %683 = vmatmul.mubr.f32.gmra.mrb[0].mxu0 %v595
        %v684 = vpop.f32.mrb[0].mxu0
        %v685 = vadd.f32 %v556, %v684
        %v686 = vpop.f32.mrb[0].mxu0
        %687 = vmatprep.mubr.f32.mxu0 0.0
        %688 = vmatmul.mubr.f32.gmra.mrb[0].mxu0 %v598
        %v689 = vpop.f32.mrb[0].mxu0
        %v690 = vadd.f32 %v561, %v689
        %v691 = vpop.f32.mrb[0].mxu0
        %692 = vmatprep.mubr.f32.mxu0 0.0
        %693 = vmatmul.mubr.f32.gmra.mrb[0].mxu0 %v601
        %v694 = vpop.f32.mrb[0].mxu0
        %v695 = vadd.f32 %v566, %v694
        %v696 = vpop.f32.mrb[0].mxu0
        %697 = vmatprep.mubr.f32.mxu0 0.0
        %698 = vmatmul.mubr.f32.gmra.mrb[0].mxu0 %v604
        %v699 = vpop.f32.mrb[0].mxu0
        %v700 = vadd.f32 %v571, %v699
        %v701 = vpop.f32.mrb[0].mxu0
        %702 = vmatprep.mubr.f32.mxu0 0.0
        %703 = vmatmul.mubr.f32.gmra.mrb[0].mxu0 %v607
        %v704 = vpop.f32.mrb[0].mxu0
        %v705 = vadd.f32 %v576, %v704
        %v706 = vpop.f32.mrb[0].mxu0
        %707 = vmatprep.mubr.f32.mxu0 0.0
        %708 = vmatmul.mubr.f32.gmra.mrb[0].mxu0 %v610
        %v709 = vpop.f32.mrb[0].mxu0
        %v710 = vadd.f32 %v581, %v709
        %v711 = vpop.f32.mrb[0].mxu0
        %712 = vmatprep.mubr.f32.mxu0 0.0
        %713 = vmatmul.mubr.f32.gmra.mrb[0].mxu0 %v613
        %v714 = vpop.f32.mrb[0].mxu0
        %v715 = vadd.f32 %v586, %v714
        %v716 = vpop.f32.mrb[0].mxu0
        %717 = vmatprep.mubr.f32.mxu0 0.0
        %718 = vmatmul.mubr.f32.gmra.mrb[0].mxu0 %v616
        %v719 = vpop.f32.mrb[0].mxu0
        %v720 = vadd.f32 %v591, %v719
        %v721 = vpop.f32.mrb[0].mxu0
        %722 = vdwg.mxu0
        %v723 = vmax.f32 %v685, 0.0
        %v724 = vmax.f32 %v690, 0.0
        %v725 = vmax.f32 %v695, 0.0
        %v726 = vmax.f32 %v700, 0.0
        %v727 = vmax.f32 %v705, 0.0
        %v728 = vmax.f32 %v710, 0.0
        %v729 = vmax.f32 %v715, 0.0
        %v730 = vmax.f32 %v720, 0.0
        %732 = vset.pattern.permute.xlu0 0
        %733 = vperm.xlu0 %732, %v361
        %v734 = vpop.permute.xlu0 %733
        %737 = vset.pattern.permute.xlu0 0
        %738 = vperm.xlu0 %737, %v362
        %v739 = vpop.permute.xlu0 %738
        %742 = vset.pattern.permute.xlu0 0
        %743 = vperm.xlu0 %742, %v363
        %v744 = vpop.permute.xlu0 %743
        %747 = vset.pattern.permute.xlu0 0
        %748 = vperm.xlu0 %747, %v364
        %v749 = vpop.permute.xlu0 %748
        %vm751 = vcmask 523264
        %v753 = vsel %vm751, %v357, 0
        %v756 = vsel %vm751, %v358, 0
        %v759 = vsel %vm751, %v359, 0
        %v762 = vsel %vm751, %v360, 0
        %764 = vmatprep.subr.mxu0 0.0
        %765 = vmatpush1.msra.mxu0 %v723
        %766 = vmatprep.subr.mxu0 0.0
        %767 = vmatpush1.msra.mxu0 %v724
        %768 = vmatprep.subr.mxu0 0.0
        %769 = vmatpush1.msra.mxu0 %v725
        %770 = vmatprep.subr.mxu0 0.0
        %771 = vmatpush1.msra.mxu0 %v726
        %772 = vmatprep.subr.mxu0 0.0
        %773 = vmatpush1.msra.mxu0 %v727
        %774 = vmatprep.subr.mxu0 0.0
        %775 = vmatpush1.msra.mxu0 %v728
        %776 = vmatprep.subr.mxu0 0.0
        %777 = vmatpush1.msra.mxu0 %v729
        %778 = vmatprep.subr.mxu0 0.0
        %779 = vmatpush1.msra.mxu0 %v730
        %780 = vmatprep.subr.mxu0 0.0
        %781 = vmatpush1.msra.mxu0 0.0
        %782 = vmatprep.subr.mxu0 0.0
        %783 = vmatpush1.msra.mxu0 0.0
        %784 = vmatprep.subr.mxu0 0.0
        %785 = vmatpush1.msra.mxu0 0.0
        %786 = vmatprep.subr.mxu0 0.0
        %787 = vmatpush1.msra.mxu0 0.0
        %788 = vmatprep.subr.mxu0 0.0
        %789 = vmatpush1.msra.mxu0 0.0
        %790 = vmatprep.subr.mxu0 0.0
        %791 = vmatpush1.msra.mxu0 0.0
        %792 = vmatprep.subr.mxu0 0.0
        %793 = vmatpush1.msra.mxu0 0.0
        %794 = vmatprep.subr.mxu0 0.0
        %795 = vmatpush1.msra.mxu0 0.0
        %796 = vmatprep.subr.mxu0 0.0
        %797 = vmatpush1.msra.mxu0 0.0
        %798 = vmatprep.subr.mxu0 0.0
        %799 = vmatpush1.msra.mxu0 0.0
        %800 = vmatprep.subr.mxu0 0.0
        %801 = vmatpush1.msra.mxu0 0.0
        %802 = vmatprep.subr.mxu0 0.0
        %803 = vmatpush1.msra.mxu0 0.0
        %804 = vmatprep.subr.mxu0 0.0
        %805 = vmatpush1.msra.mxu0 0.0
        %806 = vmatprep.subr.mxu0 0.0
        %807 = vmatpush1.msra.mxu0 0.0
        %808 = vmatprep.subr.mxu0 0.0
        %809 = vmatpush1.msra.mxu0 0.0
        %810 = vmatprep.subr.mxu0 0.0
        %811 = vmatpush1.msra.mxu0 0.0
        %812 = vmatprep.subr.mxu0 0.0
        %813 = vmatpush1.msra.mxu0 0.0
        %814 = vmatprep.subr.mxu0 0.0
        %815 = vmatpush1.msra.mxu0 0.0
        %816 = vmatprep.subr.mxu0 0.0
        %817 = vmatpush1.msra.mxu0 0.0
        %818 = vmatprep.subr.mxu0 0.0
        %819 = vmatpush1.msra.mxu0 0.0
        %820 = vmatprep.subr.mxu0 0.0
        %821 = vmatpush1.msra.mxu0 0.0
        %822 = vmatprep.subr.mxu0 0.0
        %823 = vmatpush1.msra.mxu0 0.0
        %824 = vmatprep.subr.mxu0 0.0
        %825 = vmatpush1.msra.mxu0 0.0
        %826 = vmatprep.subr.mxu0 0.0
        %827 = vmatpush1.msra.mxu0 0.0
        %828 = vmatprep.mubr.f32.mxu0 0.0
        %829 = vmatmul.mubr.f32.gmra.mrb[0].mxu0 %v753
        %v830 = vpop.f32.mrb[0].mxu0
        %v831 = vadd.f32 %v734, %v830
        %v832 = vpop.f32.mrb[0].mxu0
        %833 = vmatprep.mubr.f32.mxu0 0.0
        %834 = vmatmul.mubr.f32.gmra.mrb[0].mxu0 %v756
        %v835 = vpop.f32.mrb[0].mxu0
        %v836 = vadd.f32 %v739, %v835
        %v837 = vpop.f32.mrb[0].mxu0
        %838 = vmatprep.mubr.f32.mxu0 0.0
        %839 = vmatmul.mubr.f32.gmra.mrb[0].mxu0 %v759
        %v840 = vpop.f32.mrb[0].mxu0
        %v841 = vadd.f32 %v744, %v840
        %v842 = vpop.f32.mrb[0].mxu0
        %843 = vmatprep.mubr.f32.mxu0 0.0
        %844 = vmatmul.mubr.f32.gmra.mrb[0].mxu0 %v762
        %v845 = vpop.f32.mrb[0].mxu0
        %v846 = vadd.f32 %v749, %v845
        %v847 = vpop.f32.mrb[0].mxu0
        %848 = vdwg.mxu0
        %v849 = vmax.f32 %v831, 0.0
        %v850 = vmax.f32 %v836, 0.0
        %v851 = vmax.f32 %v841, 0.0
        %v852 = vmax.f32 %v846, 0.0
        %854 = vset.pattern.permute.xlu0 0
        %855 = vperm.xlu0 %854, %v366
        %v856 = vpop.permute.xlu0 %855
        %v859 = vsel %vm593, %v365, 0
        %861 = vmatprep.subr.mxu0 0.0
        %862 = vmatpush1.msra.mxu0 %v849
        %863 = vmatprep.subr.mxu0 0.0
        %864 = vmatpush1.msra.mxu0 %v850
        %865 = vmatprep.subr.mxu0 0.0
        %866 = vmatpush1.msra.mxu0 %v851
        %867 = vmatprep.subr.mxu0 0.0
        %868 = vmatpush1.msra.mxu0 %v852
        %869 = vmatprep.subr.mxu0 0.0
        %870 = vmatpush1.msra.mxu0 0.0
        %871 = vmatprep.subr.mxu0 0.0
        %872 = vmatpush1.msra.mxu0 0.0
        %873 = vmatprep.subr.mxu0 0.0
        %874 = vmatpush1.msra.mxu0 0.0
        %875 = vmatprep.subr.mxu0 0.0
        %876 = vmatpush1.msra.mxu0 0.0
        %877 = vmatprep.subr.mxu0 0.0
        %878 = vmatpush1.msra.mxu0 0.0
        %879 = vmatprep.subr.mxu0 0.0
        %880 = vmatpush1.msra.mxu0 0.0
        %881 = vmatprep.subr.mxu0 0.0
        %882 = vmatpush1.msra.mxu0 0.0
        %883 = vmatprep.subr.mxu0 0.0
        %884 = vmatpush1.msra.mxu0 0.0
        %885 = vmatprep.subr.mxu0 0.0
        %886 = vmatpush1.msra.mxu0 0.0
        %887 = vmatprep.subr.mxu0 0.0
        %888 = vmatpush1.msra.mxu0 0.0
        %889 = vmatprep.subr.mxu0 0.0
        %890 = vmatpush1.msra.mxu0 0.0
        %891 = vmatprep.subr.mxu0 0.0
        %892 = vmatpush1.msra.mxu0 0.0
        %893 = vmatprep.subr.mxu0 0.0
        %894 = vmatpush1.msra.mxu0 0.0
        %895 = vmatprep.subr.mxu0 0.0
        %896 = vmatpush1.msra.mxu0 0.0
        %897 = vmatprep.subr.mxu0 0.0
        %898 = vmatpush1.msra.mxu0 0.0
        %899 = vmatprep.subr.mxu0 0.0
        %900 = vmatpush1.msra.mxu0 0.0
        %901 = vmatprep.subr.mxu0 0.0
        %902 = vmatpush1.msra.mxu0 0.0
        %903 = vmatprep.subr.mxu0 0.0
        %904 = vmatpush1.msra.mxu0 0.0
        %905 = vmatprep.subr.mxu0 0.0
        %906 = vmatpush1.msra.mxu0 0.0
        %907 = vmatprep.subr.mxu0 0.0
        %908 = vmatpush1.msra.mxu0 0.0
        %909 = vmatprep.subr.mxu0 0.0
        %910 = vmatpush1.msra.mxu0 0.0
        %911 = vmatprep.subr.mxu0 0.0
        %912 = vmatpush1.msra.mxu0 0.0
        %913 = vmatprep.subr.mxu0 0.0
        %914 = vmatpush1.msra.mxu0 0.0
        %915 = vmatprep.subr.mxu0 0.0
        %916 = vmatpush1.msra.mxu0 0.0
        %917 = vmatprep.subr.mxu0 0.0
        %918 = vmatpush1.msra.mxu0 0.0
        %919 = vmatprep.subr.mxu0 0.0
        %920 = vmatpush1.msra.mxu0 0.0
        %921 = vmatprep.subr.mxu0 0.0
        %922 = vmatpush1.msra.mxu0 0.0
        %923 = vmatprep.subr.mxu0 0.0
        %924 = vmatpush1.msra.mxu0 0.0
        %925 = vmatprep.mubr.f32.mxu0 0.0
        %926 = vmatmul.mubr.f32.gmra.mrb[0].mxu0 %v859
        %v927 = vpop.f32.mrb[0].mxu0
        %v928 = vadd.f32 %v856, %v927
        %v929 = vpop.f32.mrb[0].mxu0
        %930 = vdwg.mxu0
        %v931 = vmin.f32 %v928, 20.0
        %vm932 = vcmp.gt.f32.partialorder %v928, 20.0
        %v933 = vmul.f32 %v931, 1.442695
        %v934 = vpow.pop %v933
        %v935 = vadd.f32 %v934, 1.0
        %v936 = vlog2.pop %v935
        %v937 = vmul.f32 %v936, 0.6931472
        %v938 = vmul.f32 -0.5, %v934
        %v939 = vadd.f32 %v938, 1.0
        %v940 = vmul.f32 %v939, %v934
        %v941 = vand.u32 2147483647, %v934
        %vm942 = vcmp.lt.f32.partialorder %v941, 0.0004427343
        %v943 = vsel %vm942, %v940, %v937
        %v944 = vsel %vm932, %v928, %v943
        %945 = vst [vmem:[%s326] sm:$0xff] %v944
        %s946 = sand.u32 %s225, 1
        %s947 = scalar_lea.sflag [#allocation3], %s946
        %s948 = sand.u32 %s225, 1
        %s949 = smul.addr %s948, 8
        %s950 = scalar_lea.vmem [#allocation2], %s949
        // Predicated region
        $region57: #{matrix_factorization_net.1} parent=55 // pred_check
          %p951 = pneg %p235
        $region58: #{matrix_factorization_net.1} parent=55 // pred_check_branch
          %953 = sbr.rel (%p951) target = $region60
        $region59: #{matrix_factorization_net.1} parent=55 // pred_region
          %s955 = ssub.s32 128, 128
          %956 = vsyncadd %s947, %s955
          %s957 = smul.addr %s23, 128
          %s958 = scalar_lea.hbm %s9, %s957
          %s960 = sshll.u32 %s950, 4
          %s961 = int_to_ptr.vmem [resolvable:$true] %s960
          %963 = dma.vmem_to_hbm [thread:$0]  %s961, 128, %s958, %s947
        $region60: #{matrix_factorization_net.1} parent=55 // pred_fallthru
          _
      $region56: #{matrix_factorization_net.1} parent=5 // pred_fallthru
        _
      %p964 = scmp.le.s32.totalorder 2, %s18
      // Predicated region
      $region61: #{matrix_factorization_net.1} parent=5 // pred_check
        %p965 = pneg %p964
      $region62: #{matrix_factorization_net.1} parent=5 // pred_check_branch
        %967 = sbr.rel (%p965) target = $region64
      $region63: #{matrix_factorization_net.1} parent=5 // pred_region
        %s968 = ssub.s32 %s18, 2
        // Predicated region
        $region65: #{matrix_factorization_net.1} parent=63 // pred_check
          %p969 = pneg %p241
        $region66: #{matrix_factorization_net.1} parent=63 // pred_check_branch
          %971 = sbr.rel (%p969) target = $region68
        $region67: #{matrix_factorization_net.1} parent=63 // pred_region
          %s972 = sand.u32 %s226, 1
          %s973 = scalar_lea.sflag [#allocation3], %s972
          %s974 = sand.u32 %s226, 1
          %s975 = smul.addr %s974, 8
          %s976 = scalar_lea.vmem [#allocation2], %s975
          %977 = dma.done %s973, 128
        $region68: #{matrix_factorization_net.1} parent=63 // pred_fallthru
          _
      $region64: #{matrix_factorization_net.1} parent=5 // pred_fallthru
        _
    $region6: #{matrix_factorization_net.1} parent=1 // loop_footer
      %s22 = sadd.s32 1, %s18
    $region7: #{matrix_factorization_net.1} parent=1 // loop_footer_branch
      %17 = sbr.rel target = $region3
    $region8: #{matrix_factorization_net.1} parent=1 // loop_exit
      _
    %978 = vsyncpa [#allocation3], 1
    %s979 = scalar_lea.sflag [#allocation3], 1
    %980 = vsyncpa %s979, 1

</llo_original>
